<compile_context>
chip_gen: v7x
topology: tpu7x:2x2x1
jax: 0.10.0
libtpu: 0.0.40
codegen_flags: <defaults>
</compile_context>

<pallas_src>
import functools

import jax
import jax.numpy as jnp
from jax.experimental import pallas as pl
from jax.experimental.pallas import tpu as pltpu

LANE = 128


def _round_up(n, m):
    return ((n + m - 1) // m) * m


def _cdiv(a, b):
    return -(-a // b)


def dqn_kernel(x_ref, w1_ref, b1_ref, w2_ref, b2_ref, w3_ref, b3_ref, o_ref):
    # fc1 + relu  (x cast to bf16 in-kernel; bf16 operands, f32 accumulation on the MXU)
    x = x_ref[...].astype(jnp.bfloat16)
    h1 = jnp.dot(x, w1_ref[...], preferred_element_type=jnp.float32)
    h1 = jnp.maximum(h1 + b1_ref[...], 0.0)
    # fc2 + relu
    h2 = jnp.dot(h1.astype(jnp.bfloat16), w2_ref[...],
                 preferred_element_type=jnp.float32)
    h2 = jnp.maximum(h2 + b2_ref[...], 0.0)
    # fc3 (output lane-padded to 128 columns; padded columns have zero weight/bias)
    out = jnp.dot(h2.astype(jnp.bfloat16), w3_ref[...],
                  preferred_element_type=jnp.float32)
    o_ref[...] = (out + b3_ref[...]).astype(o_ref.dtype)  # bf16 lane-dense store


def _choose_batch_tile(B, b_tile):
    """Pick a batch tile that (a) keeps round-up waste small and (b) yields >=2 grid
    steps when B >= 16 so both v7x TensorCores get work."""
    n_steps = max(1, _cdiv(B, b_tile))
    if B >= 16:
        n_steps = max(n_steps, 2)
    bt = _round_up(_cdiv(B, n_steps), 8)
    padded_b = _round_up(B, bt)
    return bt, padded_b


@functools.partial(jax.jit, static_argnames=("action_size", "b_tile"))
def dqn_forward(x, params, *, action_size, b_tile=2048):
    """x: (B, state_size) float32. params: transposed (in,out) bf16 weights, f32 biases,
    with fc3 weight/bias already lane-padded to 128 output columns."""
    w1, b1 = params["w1"], params["b1"]
    w2, b2 = params["w2"], params["b2"]
    w3p, b3p = params["w3p"], params["b3p"]

    B, S = x.shape
    n_pad = w3p.shape[1]                       # 128 (lane-dense padded fc3 width)

    bt, padded_b = _choose_batch_tile(B, b_tile)
    if padded_b != B:
        x = jnp.pad(x, ((0, padded_b - B), (0, 0)))

    const = lambda a: pl.BlockSpec(a.shape, lambda i: (0, 0))  # resident in VMEM

    out = pl.pallas_call(
        dqn_kernel,
        out_shape=jax.ShapeDtypeStruct((padded_b, n_pad), jnp.bfloat16),
        grid=(padded_b // bt,),
        in_specs=[
            pl.BlockSpec((bt, S), lambda i: (i, 0)),           # x: streamed over batch
            const(w1), const(b1), const(w2), const(b2),        # resident weights/biases
            const(w3p), const(b3p),
        ],
        out_specs=pl.BlockSpec((bt, n_pad), lambda i: (i, 0)),
        compiler_params=pltpu.CompilerParams(
            dimension_semantics=("parallel",),                 # v7x: shard batch over 2 TCs
        ),
    )(x, w1, b1, w2, b2, w3p, b3p)

    return out[:B, :action_size].astype(jnp.float32)


def init_dqn_params(key, state_size, action_size, hidden=128):
    """Mimics nn.Linear uniform(-1/sqrt(fan_in), 1/sqrt(fan_in)) init.
    Weights stored transposed (in_features, out_features), bf16 (halves DMA).
    fc3 weight/bias are lane-padded to 128 output columns ONCE here."""
    ks = jax.random.split(key, 6)

    def lin(kw, kb, fan_in, fan_out):
        bound = 1.0 / jnp.sqrt(fan_in)
        w = jax.random.uniform(kw, (fan_in, fan_out), jnp.float32, -bound, bound)
        b = jax.random.uniform(kb, (1, fan_out), jnp.float32, -bound, bound)
        return w.astype(jnp.bfloat16), b

    w1, b1 = lin(ks[0], ks[1], state_size, hidden)
    w2, b2 = lin(ks[2], ks[3], hidden, hidden)
    w3, b3 = lin(ks[4], ks[5], hidden, action_size)

    n_pad = _round_up(max(action_size, LANE), LANE)
    w3p = jnp.zeros((hidden, n_pad), w3.dtype).at[:, :action_size].set(w3)
    b3p = jnp.zeros((1, n_pad), b3.dtype).at[:, :action_size].set(b3)

    return {"w1": w1, "b1": b1, "w2": w2, "b2": b2, "w3p": w3p, "b3p": b3p}


def dqn_reference(x, p, action_size):
    """f32 reference using the same bf16-rounded inputs/weights."""
    xf = x.astype(jnp.bfloat16).astype(jnp.float32)
    w1 = p["w1"].astype(jnp.float32)
    w2 = p["w2"].astype(jnp.float32)
    w3 = p["w3p"][:, :action_size].astype(jnp.float32)
    b3 = p["b3p"][:, :action_size]
    h1 = jnp.maximum(xf @ w1 + p["b1"], 0.0)
    h2 = jnp.maximum(h1 @ w2 + p["b2"], 0.0)
    return h2 @ w3 + b3


if __name__ == "__main__":
    key = jax.random.PRNGKey(0)
    k_param, k_x1, k_x2 = jax.random.split(key, 3)

    state_size, action_size = 16, 4
    params = init_dqn_params(k_param, state_size, action_size)

    # Small toy batch (typical DQN replay minibatch) — single grid step.
    x_small = jax.random.normal(k_x1, (8, state_size), jnp.float32)
    out_small = jax.block_until_ready(
        dqn_forward(x_small, params, action_size=action_size))
    ref_small = dqn_reference(x_small, params, action_size)
    assert out_small.shape == (8, action_size)
    assert jnp.allclose(out_small, ref_small, atol=2e-2, rtol=2e-2)

    # Larger, non-tile-multiple batch: exercises batch padding and the >=2-step grid
    # (bt=152, padded_b=304, grid=2 -> both v7x TCs get work, only 4 wasted rows).
    x_big = jax.random.normal(k_x2, (300, state_size), jnp.float32)
    out_big = jax.block_until_ready(
        dqn_forward(x_big, params, action_size=action_size))
    ref_big = dqn_reference(x_big, params, action_size)
    assert out_big.shape == (300, action_size)
    assert jnp.allclose(out_big, ref_big, atol=2e-2, rtol=2e-2)

    print("KERNEL_OK")
</pallas_src>

<mosaic_0001>
module attributes {stable_mosaic.version = 11 : i64} {
  func.func @dqn_kernel(%arg0: i32, %arg1: memref<8x16xf32, #tpu.memory_space<vmem>>, %arg2: memref<16x128xbf16, #tpu.memory_space<vmem>>, %arg3: memref<1x128xf32, #tpu.memory_space<vmem>>, %arg4: memref<128x128xbf16, #tpu.memory_space<vmem>>, %arg5: memref<1x128xf32, #tpu.memory_space<vmem>>, %arg6: memref<128x128xbf16, #tpu.memory_space<vmem>>, %arg7: memref<1x128xf32, #tpu.memory_space<vmem>>, %arg8: memref<8x128xbf16, #tpu.memory_space<vmem>>) attributes {dimension_semantics = [#tpu.dimension_semantics<parallel>], iteration_bounds = array<i64: 1>, scalar_prefetch = 0 : i64, scratch_operands = 0 : i64, tpu.core_type = #tpu.core_type<tc>, window_params = [{transform_indices = @transform_0, window_bounds = array<i64: 8, 16>}, {pipeline_mode = #tpu.pipeline_mode<synchronous>, transform_indices = @transform_1, window_bounds = array<i64: 16, 128>}, {pipeline_mode = #tpu.pipeline_mode<synchronous>, transform_indices = @transform_2, window_bounds = array<i64: 1, 128>}, {pipeline_mode = #tpu.pipeline_mode<synchronous>, transform_indices = @transform_3, window_bounds = array<i64: 128, 128>}, {pipeline_mode = #tpu.pipeline_mode<synchronous>, transform_indices = @transform_4, window_bounds = array<i64: 1, 128>}, {pipeline_mode = #tpu.pipeline_mode<synchronous>, transform_indices = @transform_5, window_bounds = array<i64: 128, 128>}, {pipeline_mode = #tpu.pipeline_mode<synchronous>, transform_indices = @transform_6, window_bounds = array<i64: 1, 128>}, {transform_indices = @transform_7, window_bounds = array<i64: 8, 128>}]} {
    %c0 = arith.constant 0 : index
    %c0_0 = arith.constant 0 : index
    %0 = vector.load %arg1[%c0, %c0_0] : memref<8x16xf32, #tpu.memory_space<vmem>>, vector<8x16xf32>
    %1 = arith.truncf %0 : vector<8x16xf32> to vector<8x16xbf16>
    %c0_1 = arith.constant 0 : index
    %c0_2 = arith.constant 0 : index
    %2 = vector.load %arg2[%c0_1, %c0_2] : memref<16x128xbf16, #tpu.memory_space<vmem>>, vector<16x128xbf16>
    %cst = arith.constant dense<0.000000e+00> : vector<8x128xf32>
    %3 = tpu.matmul %1, %2, %cst {dimension_numbers = #tpu.dot_dimension_numbers<[1], [0], [0], [1], [0, 0, 1, 1], [], []>} : vector<8x16xbf16>, vector<16x128xbf16>, vector<8x128xf32> -> vector<8x128xf32>
    %c0_3 = arith.constant 0 : index
    %c0_4 = arith.constant 0 : index
    %4 = vector.load %arg3[%c0_3, %c0_4] : memref<1x128xf32, #tpu.memory_space<vmem>>, vector<1x128xf32>
    %5 = vector.broadcast %4 : vector<1x128xf32> to vector<8x128xf32>
    %6 = arith.addf %3, %5 : vector<8x128xf32>
    %cst_5 = arith.constant 0.000000e+00 : f32
    %7 = vector.broadcast %cst_5 : f32 to vector<8x128xf32>
    %8 = arith.maximumf %6, %7 : vector<8x128xf32>
    %9 = arith.truncf %8 : vector<8x128xf32> to vector<8x128xbf16>
    %c0_6 = arith.constant 0 : index
    %c0_7 = arith.constant 0 : index
    %10 = vector.load %arg4[%c0_6, %c0_7] : memref<128x128xbf16, #tpu.memory_space<vmem>>, vector<128x128xbf16>
    %cst_8 = arith.constant dense<0.000000e+00> : vector<8x128xf32>
    %11 = tpu.matmul %9, %10, %cst_8 {dimension_numbers = #tpu.dot_dimension_numbers<[1], [0], [0], [1], [0, 0, 1, 1], [], []>} : vector<8x128xbf16>, vector<128x128xbf16>, vector<8x128xf32> -> vector<8x128xf32>
    %c0_9 = arith.constant 0 : index
    %c0_10 = arith.constant 0 : index
    %12 = vector.load %arg5[%c0_9, %c0_10] : memref<1x128xf32, #tpu.memory_space<vmem>>, vector<1x128xf32>
    %13 = vector.broadcast %12 : vector<1x128xf32> to vector<8x128xf32>
    %14 = arith.addf %11, %13 : vector<8x128xf32>
    %cst_11 = arith.constant 0.000000e+00 : f32
    %15 = vector.broadcast %cst_11 : f32 to vector<8x128xf32>
    %16 = arith.maximumf %14, %15 : vector<8x128xf32>
    %17 = arith.truncf %16 : vector<8x128xf32> to vector<8x128xbf16>
    %c0_12 = arith.constant 0 : index
    %c0_13 = arith.constant 0 : index
    %18 = vector.load %arg6[%c0_12, %c0_13] : memref<128x128xbf16, #tpu.memory_space<vmem>>, vector<128x128xbf16>
    %cst_14 = arith.constant dense<0.000000e+00> : vector<8x128xf32>
    %19 = tpu.matmul %17, %18, %cst_14 {dimension_numbers = #tpu.dot_dimension_numbers<[1], [0], [0], [1], [0, 0, 1, 1], [], []>} : vector<8x128xbf16>, vector<128x128xbf16>, vector<8x128xf32> -> vector<8x128xf32>
    %c0_15 = arith.constant 0 : index
    %c0_16 = arith.constant 0 : index
    %20 = vector.load %arg7[%c0_15, %c0_16] : memref<1x128xf32, #tpu.memory_space<vmem>>, vector<1x128xf32>
    %21 = vector.broadcast %20 : vector<1x128xf32> to vector<8x128xf32>
    %22 = arith.addf %19, %21 : vector<8x128xf32>
    %23 = arith.truncf %22 : vector<8x128xf32> to vector<8x128xbf16>
    %c0_17 = arith.constant 0 : index
    %c0_18 = arith.constant 0 : index
    %24 = vector.load %arg8[%c0_17, %c0_18] : memref<8x128xbf16, #tpu.memory_space<vmem>>, vector<8x128xbf16>
    tpu.vector_store %arg8[%c0_17, %c0_18], %23 {strides = array<i32>} : memref<8x128xbf16, #tpu.memory_space<vmem>>, vector<8x128xbf16>,
    return
  }
  func.func @transform_0(%arg0: i32) -> (i32, i32) {
    %c0_i32 = arith.constant 0 : i32
    %c0_i32_0 = arith.constant 0 : i32
    return %arg0, %c0_i32 : i32, i32
  }
  func.func @transform_1(%arg0: i32) -> (i32, i32) {
    %c0_i32 = arith.constant 0 : i32
    %c0_i32_0 = arith.constant 0 : i32
    %c0_i32_1 = arith.constant 0 : i32
    return %c0_i32, %c0_i32_0 : i32, i32
  }
  func.func @transform_2(%arg0: i32) -> (i32, i32) {
    %c0_i32 = arith.constant 0 : i32
    %c0_i32_0 = arith.constant 0 : i32
    %c0_i32_1 = arith.constant 0 : i32
    return %c0_i32, %c0_i32_0 : i32, i32
  }
  func.func @transform_3(%arg0: i32) -> (i32, i32) {
    %c0_i32 = arith.constant 0 : i32
    %c0_i32_0 = arith.constant 0 : i32
    %c0_i32_1 = arith.constant 0 : i32
    return %c0_i32, %c0_i32_0 : i32, i32
  }
  func.func @transform_4(%arg0: i32) -> (i32, i32) {
    %c0_i32 = arith.constant 0 : i32
    %c0_i32_0 = arith.constant 0 : i32
    %c0_i32_1 = arith.constant 0 : i32
    return %c0_i32, %c0_i32_0 : i32, i32
  }
  func.func @transform_5(%arg0: i32) -> (i32, i32) {
    %c0_i32 = arith.constant 0 : i32
    %c0_i32_0 = arith.constant 0 : i32
    %c0_i32_1 = arith.constant 0 : i32
    return %c0_i32, %c0_i32_0 : i32, i32
  }
  func.func @transform_6(%arg0: i32) -> (i32, i32) {
    %c0_i32 = arith.constant 0 : i32
    %c0_i32_0 = arith.constant 0 : i32
    %c0_i32_1 = arith.constant 0 : i32
    return %c0_i32, %c0_i32_0 : i32, i32
  }
  func.func @transform_7(%arg0: i32) -> (i32, i32) {
    %c0_i32 = arith.constant 0 : i32
    %c0_i32_0 = arith.constant 0 : i32
    return %arg0, %c0_i32 : i32, i32
  }
}

</mosaic_0001>

<llo_original>
// kernel: dqn_forward.1
$region0: #{dqn_forward.1}
  #allocation0 [shape = 'u32[]', space=smem, size = 0x4, offset = 0x4, fixed_abs, tag = 'smem constant byte address 0x4 - core index']
  #allocation1 [shape = 'u32[144,128]{1,0:T(1,128)}', space=vmem, size = 0x12000, scoped, tag = 'internal scratch']
  %s0 = inlined_call_operand.hbm [shape: f32[8,16], index: 0, kind: input, shape index: {}]
  %s1 = inlined_call_operand.vmem [shape: bf16[16,128], index: 1, kind: input, shape index: {}]
  %s2 = inlined_call_operand.vmem [shape: f32[1,128], index: 2, kind: input, shape index: {}]
  %s3 = inlined_call_operand.hbm [shape: bf16[128,128], index: 3, kind: input, shape index: {}]
  %s4 = inlined_call_operand.vmem [shape: f32[1,128], index: 4, kind: input, shape index: {}]
  %s5 = inlined_call_operand.hbm [shape: bf16[128,128], index: 5, kind: input, shape index: {}]
  %s6 = inlined_call_operand.vmem [shape: f32[1,128], index: 6, kind: input, shape index: {}]
  %s7 = inlined_call_operand.vmem [shape: bf16[8,128], index: 7, kind: output, shape index: {}]
  %s8 = sld [smem:[#allocation0]]
  $region50: #{dqn_forward.1} parent=0
    _
  %s10 = ssub.s32 1, %s8
  %s11 = scalar_select 0, %s10, %s8
  $region1: #{dqn_forward.1} parent=0
    #allocation2 [shape = 'u8[4096]{0}', space=vmem, size = 0x1000, scoped, tag = 'input window, operand 0, single buffered']
    #allocation3 [shape = 's32[1]{0}', space=sflag, size = 0x4, scoped, tag = 'scoped memory for dqn_forward.1']
    #allocation4 [shape = 'u8[32768]{0}', space=vmem, size = 0x8000, scoped, tag = 'input window, operand 3, single buffered']
    #allocation5 [shape = 's32[1]{0}', space=sflag, size = 0x4, scoped, tag = 'scoped memory for dqn_forward.1']
    #allocation6 [shape = 'u8[32768]{0}', space=vmem, size = 0x8000, scoped, tag = 'input window, operand 5, single buffered']
    %12 = vsyncpa [#allocation3], 0
    %13 = vsyncpa [#allocation5], 0
    // Predicated region
    $region2: #{dqn_forward.1} parent=1 // pred_check
      _
    $region3: #{dqn_forward.1} parent=1 // pred_check_branch
      %15 = sbr.rel (0) target = $region5
    $region4: #{dqn_forward.1} parent=1 // pred_region
      %s17 = ssub.s32 128, 128
      %18 = vsyncadd [#allocation3], %s17
      %s20 = sshll.u32 [#allocation2], 4
      %s21 = int_to_ptr.vmem [resolvable:$true] %s20
      %23 = dma.hbm_to_vmem [thread:$0]  %s0, 128, %s21, [#allocation3]
    $region5: #{dqn_forward.1} parent=1 // pred_fallthru
      _
    // Predicated region
    $region6: #{dqn_forward.1} parent=1 // pred_check
      _
    $region7: #{dqn_forward.1} parent=1 // pred_check_branch
      %25 = sbr.rel (0) target = $region9
    $region8: #{dqn_forward.1} parent=1 // pred_region
      _
    $region9: #{dqn_forward.1} parent=1 // pred_fallthru
      _
    // Predicated region
    $region10: #{dqn_forward.1} parent=1 // pred_check
      _
    $region11: #{dqn_forward.1} parent=1 // pred_check_branch
      %27 = sbr.rel (0) target = $region13
    $region12: #{dqn_forward.1} parent=1 // pred_region
      _
    $region13: #{dqn_forward.1} parent=1 // pred_fallthru
      _
    // Predicated region
    $region14: #{dqn_forward.1} parent=1 // pred_check
      _
    $region15: #{dqn_forward.1} parent=1 // pred_check_branch
      %29 = sbr.rel (0) target = $region17
    $region16: #{dqn_forward.1} parent=1 // pred_region
      %s31 = ssub.s32 1024, 1024
      %32 = vsyncadd [#allocation5], %s31
      %s33 = sshll.u32 [#allocation4], 4
      %s34 = int_to_ptr.vmem [resolvable:$true] %s33
      %39 = dma.hbm_to_vmem [thread:$0]  %s3, 1024, %s34, [#allocation5], 64, 64, 4
    $region17: #{dqn_forward.1} parent=1 // pred_fallthru
      _
    // Predicated region
    $region18: #{dqn_forward.1} parent=1 // pred_check
      _
    $region19: #{dqn_forward.1} parent=1 // pred_check_branch
      %41 = sbr.rel (0) target = $region21
    $region20: #{dqn_forward.1} parent=1 // pred_region
      _
    $region21: #{dqn_forward.1} parent=1 // pred_fallthru
      _
    // Predicated region
    $region22: #{dqn_forward.1} parent=1 // pred_check
      _
    $region23: #{dqn_forward.1} parent=1 // pred_check_branch
      %43 = sbr.rel (0) target = $region25
    $region24: #{dqn_forward.1} parent=1 // pred_region
      %s45 = ssub.s32 1024, 1024
      %46 = vsyncadd [#allocation5], %s45
      %s47 = sshll.u32 [#allocation6], 4
      %s48 = int_to_ptr.vmem [resolvable:$true] %s47
      %53 = dma.hbm_to_vmem [thread:$0]  %s5, 1024, %s48, [#allocation5], 64, 64, 4
    $region25: #{dqn_forward.1} parent=1 // pred_fallthru
      _
    // Predicated region
    $region26: #{dqn_forward.1} parent=1 // pred_check
      _
    $region27: #{dqn_forward.1} parent=1 // pred_check_branch
      %55 = sbr.rel (0) target = $region29
    $region28: #{dqn_forward.1} parent=1 // pred_region
      _
    $region29: #{dqn_forward.1} parent=1 // pred_fallthru
      _
    // Predicated region
    $region30: #{dqn_forward.1} parent=1 // pred_check
      _
    $region31: #{dqn_forward.1} parent=1 // pred_check_branch
      %57 = sbr.rel (0) target = $region33
    $region32: #{dqn_forward.1} parent=1 // pred_region
      %58 = dma.done [#allocation3], 128
    $region33: #{dqn_forward.1} parent=1 // pred_fallthru
      _
    // Predicated region
    $region34: #{dqn_forward.1} parent=1 // pred_check
      _
    $region35: #{dqn_forward.1} parent=1 // pred_check_branch
      %60 = sbr.rel (0) target = $region37
    $region36: #{dqn_forward.1} parent=1 // pred_region
      %61 = dma.done [#allocation5], 1024
    $region37: #{dqn_forward.1} parent=1 // pred_fallthru
      _
    // Predicated region
    $region38: #{dqn_forward.1} parent=1 // pred_check
      _
    $region39: #{dqn_forward.1} parent=1 // pred_check_branch
      %63 = sbr.rel (0) target = $region41
    $region40: #{dqn_forward.1} parent=1 // pred_region
      %64 = dma.done [#allocation5], 1024
    $region41: #{dqn_forward.1} parent=1 // pred_fallthru
      _
    %v66 = vld [vmem:[#allocation2] sm:$0xff]
    %v67 = vpack.c.bf16 %v66, %v66
    %v68 = vld [vmem:[%s1] sm:$0xf]
    %v69 = vld [vmem:[%s1 + $0x4] sm:$0xf]
    %v70 = vld [vmem:[%s2] sm:$0x1]
    %v72 = vlaneseq
    %v73 = vshrl.u32 %v72, 7
    %v74 = vsub.s32 0, %v73
    %v75 = vrot.slane %v70, %v74
    %v79 = vunpack.c.l.b16 %v68
    %v80 = vunpack.c.l.b16 %v69
    %v81 = vpack.c.b16 %v80, %v79
    %vm83 = vcmask 130048
    %v85 = vsel %vm83, %v67, 0
    %87 = vmatprep.subr.bf16.mxu0 0
    %88 = vmatpush1.bf16.msra.mxu0 %v81
    %89 = vmatprep.subr.bf16.mxu0 0
    %90 = vmatpush1.bf16.msra.mxu0 0
    %91 = vmatprep.subr.bf16.mxu0 0
    %92 = vmatpush1.bf16.msra.mxu0 0
    %93 = vmatprep.subr.bf16.mxu0 0
    %94 = vmatpush1.bf16.msra.mxu0 0
    %95 = vmatprep.subr.bf16.mxu0 0
    %96 = vmatpush1.bf16.msra.mxu0 0
    %97 = vmatprep.subr.bf16.mxu0 0
    %98 = vmatpush1.bf16.msra.mxu0 0
    %99 = vmatprep.subr.bf16.mxu0 0
    %100 = vmatpush1.bf16.msra.mxu0 0
    %101 = vmatprep.subr.bf16.mxu0 0
    %102 = vmatpush1.bf16.msra.mxu0 0
    %103 = vmatprep.subr.bf16.mxu0 0
    %104 = vmatpush1.bf16.msra.mxu0 0
    %105 = vmatprep.subr.bf16.mxu0 0
    %106 = vmatpush1.bf16.msra.mxu0 0
    %107 = vmatprep.subr.bf16.mxu0 0
    %108 = vmatpush1.bf16.msra.mxu0 0
    %109 = vmatprep.subr.bf16.mxu0 0
    %110 = vmatpush1.bf16.msra.mxu0 0
    %111 = vmatprep.subr.bf16.mxu0 0
    %112 = vmatpush1.bf16.msra.mxu0 0
    %113 = vmatprep.subr.bf16.mxu0 0
    %114 = vmatpush1.bf16.msra.mxu0 0
    %115 = vmatprep.subr.bf16.mxu0 0
    %116 = vmatpush1.bf16.msra.mxu0 0
    %117 = vmatprep.subr.bf16.mxu0 0
    %118 = vmatpush1.bf16.msra.mxu0 0
    %119 = vmatprep.mubr.bf16.mxu0 0
    %120 = vmatmul.mubr.bf16.gmra.mrb[0].mxu0 %v85
    %v121 = vpop.f32.mrb[0].mxu0
    %v122 = vadd.f32 %v75, %v121
    %v123 = vpop.f32.mrb[0].mxu0
    %v124 = vpop.f32.mrb[0].mxu0
    %v125 = vpop.f32.mrb[0].mxu0
    %126 = vdwg.mxu0
    %v127 = vmax.f32 %v122, 0.0
    %v128 = vpack.c.bf16 %v127, %v127
    %v129 = vld [vmem:[#allocation4] sm:$0xf]
    %v130 = vld [vmem:[#allocation4 + $0x4] sm:$0xf]
    %v131 = vld [vmem:[#allocation4 + $0x8] sm:$0xf]
    %v132 = vld [vmem:[#allocation4 + $0xc] sm:$0xf]
    %v133 = vld [vmem:[#allocation4 + $0x10] sm:$0xf]
    %v134 = vld [vmem:[#allocation4 + $0x14] sm:$0xf]
    %v135 = vld [vmem:[#allocation4 + $0x18] sm:$0xf]
    %v136 = vld [vmem:[#allocation4 + $0x1c] sm:$0xf]
    %v137 = vld [vmem:[#allocation4 + $0x20] sm:$0xf]
    %v138 = vld [vmem:[#allocation4 + $0x24] sm:$0xf]
    %v139 = vld [vmem:[#allocation4 + $0x28] sm:$0xf]
    %v140 = vld [vmem:[#allocation4 + $0x2c] sm:$0xf]
    %v141 = vld [vmem:[#allocation4 + $0x30] sm:$0xf]
    %v142 = vld [vmem:[#allocation4 + $0x34] sm:$0xf]
    %v143 = vld [vmem:[#allocation4 + $0x38] sm:$0xf]
    %v144 = vld [vmem:[#allocation4 + $0x3c] sm:$0xf]
    %v145 = vld [vmem:[%s4] sm:$0x1]
    %v147 = vlaneseq
    %v148 = vshrl.u32 %v147, 7
    %v149 = vsub.s32 0, %v148
    %v150 = vrot.slane %v145, %v149
    %v168 = vunpack.c.l.b16 %v129
    %v169 = vunpack.c.l.b16 %v130
    %v170 = vunpack.c.l.b16 %v131
    %v171 = vunpack.c.l.b16 %v132
    %v172 = vunpack.c.l.b16 %v133
    %v173 = vunpack.c.l.b16 %v134
    %v174 = vunpack.c.l.b16 %v135
    %v175 = vunpack.c.l.b16 %v136
    %v176 = vunpack.c.l.b16 %v137
    %v177 = vunpack.c.l.b16 %v138
    %v178 = vunpack.c.l.b16 %v139
    %v179 = vunpack.c.l.b16 %v140
    %v180 = vunpack.c.l.b16 %v141
    %v181 = vunpack.c.l.b16 %v142
    %v182 = vunpack.c.l.b16 %v143
    %v183 = vunpack.c.l.b16 %v144
    %v184 = vpack.c.b16 %v169, %v168
    %v185 = vpack.c.b16 %v171, %v170
    %v186 = vpack.c.b16 %v173, %v172
    %v187 = vpack.c.b16 %v175, %v174
    %v188 = vpack.c.b16 %v177, %v176
    %v189 = vpack.c.b16 %v179, %v178
    %v190 = vpack.c.b16 %v181, %v180
    %v191 = vpack.c.b16 %v183, %v182
    %200 = vmatprep.subr.bf16.mxu0 0
    %201 = vmatpush1.bf16.msra.mxu0 %v184
    %202 = vmatprep.subr.bf16.mxu0 0
    %203 = vmatpush1.bf16.msra.mxu0 %v185
    %204 = vmatprep.subr.bf16.mxu0 0
    %205 = vmatpush1.bf16.msra.mxu0 %v186
    %206 = vmatprep.subr.bf16.mxu0 0
    %207 = vmatpush1.bf16.msra.mxu0 %v187
    %208 = vmatprep.subr.bf16.mxu0 0
    %209 = vmatpush1.bf16.msra.mxu0 %v188
    %210 = vmatprep.subr.bf16.mxu0 0
    %211 = vmatpush1.bf16.msra.mxu0 %v189
    %212 = vmatprep.subr.bf16.mxu0 0
    %213 = vmatpush1.bf16.msra.mxu0 %v190
    %214 = vmatprep.subr.bf16.mxu0 0
    %215 = vmatpush1.bf16.msra.mxu0 %v191
    %216 = vmatprep.subr.bf16.mxu0 0
    %217 = vmatpush1.bf16.msra.mxu0 0
    %218 = vmatprep.subr.bf16.mxu0 0
    %219 = vmatpush1.bf16.msra.mxu0 0
    %220 = vmatprep.subr.bf16.mxu0 0
    %221 = vmatpush1.bf16.msra.mxu0 0
    %222 = vmatprep.subr.bf16.mxu0 0
    %223 = vmatpush1.bf16.msra.mxu0 0
    %224 = vmatprep.subr.bf16.mxu0 0
    %225 = vmatpush1.bf16.msra.mxu0 0
    %226 = vmatprep.subr.bf16.mxu0 0
    %227 = vmatpush1.bf16.msra.mxu0 0
    %228 = vmatprep.subr.bf16.mxu0 0
    %229 = vmatpush1.bf16.msra.mxu0 0
    %230 = vmatprep.subr.bf16.mxu0 0
    %231 = vmatpush1.bf16.msra.mxu0 0
    %232 = vmatprep.mubr.bf16.mxu0 0
    %233 = vmatmul.mubr.bf16.gmra.mrb[0].mxu0 %v128
    %v234 = vpop.f32.mrb[0].mxu0
    %v235 = vadd.f32 %v150, %v234
    %v236 = vpop.f32.mrb[0].mxu0
    %v237 = vpop.f32.mrb[0].mxu0
    %v238 = vpop.f32.mrb[0].mxu0
    %239 = vdwg.mxu0
    %v240 = vmax.f32 %v235, 0.0
    %v241 = vpack.c.bf16 %v240, %v240
    %v242 = vld [vmem:[#allocation6] sm:$0xf]
    %v243 = vld [vmem:[#allocation6 + $0x4] sm:$0xf]
    %v244 = vld [vmem:[#allocation6 + $0x8] sm:$0xf]
    %v245 = vld [vmem:[#allocation6 + $0xc] sm:$0xf]
    %v246 = vld [vmem:[#allocation6 + $0x10] sm:$0xf]
    %v247 = vld [vmem:[#allocation6 + $0x14] sm:$0xf]
    %v248 = vld [vmem:[#allocation6 + $0x18] sm:$0xf]
    %v249 = vld [vmem:[#allocation6 + $0x1c] sm:$0xf]
    %v250 = vld [vmem:[#allocation6 + $0x20] sm:$0xf]
    %v251 = vld [vmem:[#allocation6 + $0x24] sm:$0xf]
    %v252 = vld [vmem:[#allocation6 + $0x28] sm:$0xf]
    %v253 = vld [vmem:[#allocation6 + $0x2c] sm:$0xf]
    %v254 = vld [vmem:[#allocation6 + $0x30] sm:$0xf]
    %v255 = vld [vmem:[#allocation6 + $0x34] sm:$0xf]
    %v256 = vld [vmem:[#allocation6 + $0x38] sm:$0xf]
    %v257 = vld [vmem:[#allocation6 + $0x3c] sm:$0xf]
    %v258 = vld [vmem:[%s6] sm:$0x1]
    %v260 = vlaneseq
    %v261 = vshrl.u32 %v260, 7
    %v262 = vsub.s32 0, %v261
    %v263 = vrot.slane %v258, %v262
    %v281 = vunpack.c.l.b16 %v242
    %v282 = vunpack.c.l.b16 %v243
    %v283 = vunpack.c.l.b16 %v244
    %v284 = vunpack.c.l.b16 %v245
    %v285 = vunpack.c.l.b16 %v246
    %v286 = vunpack.c.l.b16 %v247
    %v287 = vunpack.c.l.b16 %v248
    %v288 = vunpack.c.l.b16 %v249
    %v289 = vunpack.c.l.b16 %v250
    %v290 = vunpack.c.l.b16 %v251
    %v291 = vunpack.c.l.b16 %v252
    %v292 = vunpack.c.l.b16 %v253
    %v293 = vunpack.c.l.b16 %v254
    %v294 = vunpack.c.l.b16 %v255
    %v295 = vunpack.c.l.b16 %v256
    %v296 = vunpack.c.l.b16 %v257
    %v297 = vpack.c.b16 %v282, %v281
    %v298 = vpack.c.b16 %v284, %v283
    %v299 = vpack.c.b16 %v286, %v285
    %v300 = vpack.c.b16 %v288, %v287
    %v301 = vpack.c.b16 %v290, %v289
    %v302 = vpack.c.b16 %v292, %v291
    %v303 = vpack.c.b16 %v294, %v293
    %v304 = vpack.c.b16 %v296, %v295
    %313 = vmatprep.subr.bf16.mxu0 0
    %314 = vmatpush1.bf16.msra.mxu0 %v297
    %315 = vmatprep.subr.bf16.mxu0 0
    %316 = vmatpush1.bf16.msra.mxu0 %v298
    %317 = vmatprep.subr.bf16.mxu0 0
    %318 = vmatpush1.bf16.msra.mxu0 %v299
    %319 = vmatprep.subr.bf16.mxu0 0
    %320 = vmatpush1.bf16.msra.mxu0 %v300
    %321 = vmatprep.subr.bf16.mxu0 0
    %322 = vmatpush1.bf16.msra.mxu0 %v301
    %323 = vmatprep.subr.bf16.mxu0 0
    %324 = vmatpush1.bf16.msra.mxu0 %v302
    %325 = vmatprep.subr.bf16.mxu0 0
    %326 = vmatpush1.bf16.msra.mxu0 %v303
    %327 = vmatprep.subr.bf16.mxu0 0
    %328 = vmatpush1.bf16.msra.mxu0 %v304
    %329 = vmatprep.subr.bf16.mxu0 0
    %330 = vmatpush1.bf16.msra.mxu0 0
    %331 = vmatprep.subr.bf16.mxu0 0
    %332 = vmatpush1.bf16.msra.mxu0 0
    %333 = vmatprep.subr.bf16.mxu0 0
    %334 = vmatpush1.bf16.msra.mxu0 0
    %335 = vmatprep.subr.bf16.mxu0 0
    %336 = vmatpush1.bf16.msra.mxu0 0
    %337 = vmatprep.subr.bf16.mxu0 0
    %338 = vmatpush1.bf16.msra.mxu0 0
    %339 = vmatprep.subr.bf16.mxu0 0
    %340 = vmatpush1.bf16.msra.mxu0 0
    %341 = vmatprep.subr.bf16.mxu0 0
    %342 = vmatpush1.bf16.msra.mxu0 0
    %343 = vmatprep.subr.bf16.mxu0 0
    %344 = vmatpush1.bf16.msra.mxu0 0
    %345 = vmatprep.mubr.bf16.mxu0 0
    %346 = vmatmul.mubr.bf16.gmra.mrb[0].mxu0 %v241
    %v347 = vpop.f32.mrb[0].mxu0
    %v348 = vadd.f32 %v263, %v347
    %v349 = vpop.f32.mrb[0].mxu0
    %v350 = vpop.f32.mrb[0].mxu0
    %v351 = vpop.f32.mrb[0].mxu0
    %352 = vdwg.mxu0
    %v353 = vpack.c.bf16 %v348, %v348
    %354 = vst [vmem:[%s7] sm:$0xf] %v353
    // Predicated region
    $region42: #{dqn_forward.1} parent=1 // pred_check
      _
    $region43: #{dqn_forward.1} parent=1 // pred_check_branch
      %356 = sbr.rel (0) target = $region45
    $region44: #{dqn_forward.1} parent=1 // pred_region
      _
    $region45: #{dqn_forward.1} parent=1 // pred_fallthru
      _
    // Predicated region
    $region46: #{dqn_forward.1} parent=1 // pred_check
      _
    $region47: #{dqn_forward.1} parent=1 // pred_check_branch
      %358 = sbr.rel (0) target = $region49
    $region48: #{dqn_forward.1} parent=1 // pred_region
      _
    $region49: #{dqn_forward.1} parent=1 // pred_fallthru
      _
    %359 = vsyncpa [#allocation3], 1
    %360 = vsyncpa [#allocation5], 1

</llo_original>
